<compile_context>
chip_gen: v6e
topology: v6e:2x2x1
jax: 0.10.0
libtpu: 0.0.40
codegen_flags: <defaults>
</compile_context>

<pallas_src>
import jax
import jax.numpy as jnp
from jax.experimental import pallas as pl
from jax.experimental.pallas import tpu as pltpu


def _backproj_kernel(w_ref, y_ref, o_ref):
    # w_ref: (M, K)  fused separable filter, transposed (stays VMEM-resident)
    # y_ref: (K, tn) channel-major slab of coded voxels, N on the lane axis
    # o_ref: (M, tn) backprojection block, lane-dense along N
    o_ref[...] = jnp.dot(
        w_ref[...], y_ref[...], preferred_element_type=jnp.float32
    ).astype(o_ref.dtype)


def _backproj_matmul_T(yT, w3T, max_tn=16384):
    """yT: (B, K, Nf), w3T: (M, K) -> (B, M, Nf); contraction over K."""
    B, K, Nf = yT.shape
    M = w3T.shape[0]
    # Lane-dense N tile: whole spatial volume if it fits, else a 128-multiple.
    tn = Nf if Nf <= max_tn else max_tn
    grid = (B, pl.cdiv(Nf, tn))

    return pl.pallas_call(
        _backproj_kernel,
        out_shape=jax.ShapeDtypeStruct((B, M, Nf), yT.dtype),
        grid_spec=pltpu.PrefetchScalarGridSpec(
            num_scalar_prefetch=0,
            grid=grid,
            in_specs=[
                # Full (M, K) filter, constant block index -> stays resident.
                pl.BlockSpec((M, K), lambda b, i: (0, 0)),
                # (K, tn) slab of y for batch b, tile i (batch dim squeezed).
                pl.BlockSpec((None, K, tn), lambda b, i: (b, 0, i)),
            ],
            out_specs=pl.BlockSpec((None, M, tn), lambda b, i: (b, 0, i)),
        ),
        compiler_params=pltpu.CompilerParams(
            dimension_semantics=("parallel", "parallel")),
    )(w3T, yT)


def unfilt_backproj_3d_separable(y, W1d, W2d, apply_W1d_first=True):
    """JAX/Pallas equivalent of UnfiltBackproj3DSeparable1D2DTransposeConv.forward."""
    if y.ndim == 4:
        y = y[None]
    assert y.ndim == 5, "Invalid input y dims"
    assert W1d.ndim == 5 and W2d.ndim == 5, "Invalid input W dims"
    assert y.shape[1] == W1d.shape[0] == W2d.shape[0], \
        "Number of filters in W should match number of channels of y"

    B, K, n1, n2, n3 = y.shape
    b1 = W1d.shape[-3]
    b2, b3 = W2d.shape[-2:]
    M = b1 * b2 * b3
    Nf = n1 * n2 * n3

    # Fused separable filter: W3[k, i1, i2, i3] = W1d[k, i1] * W2d[k, i2, i3].
    # apply_W1d_first only affects fp rounding order of the two transpose
    # convs; both flags must flatten in (i1, i2, i3) order (bug fix).
    A = W1d.reshape(K, b1).astype(jnp.float32)
    C = W2d.reshape(K, b2 * b3).astype(jnp.float32)
    W3T = (A[:, :, None] * C[:, None, :]).reshape(K, M).T.astype(y.dtype)  # (M, K)
    del apply_W1d_first  # mathematically identical either way

    # NCDHW is channel-major already -> (B, K, Nf) is a free view (no HBM pass).
    yT = y.reshape(B, K, Nf)

    outT = _backproj_matmul_T(yT, W3T)                       # (B, M, Nf)

    # Interleave (d, i) -> d*b + i on each spatial axis.
    # TODO(synk): this final shuffle is a single XLA copy pass; fusing it into
    # the out_spec would make the output lane-sparse (last dim n3*b3), so it
    # is intentionally left to XLA.
    out = outT.reshape(B, b1, b2, b3, n1, n2, n3)
    out = jnp.transpose(out, (0, 4, 1, 5, 2, 6, 3))          # (B,n1,b1,n2,b2,n3,b3)
    return out.reshape(B, 1, n1 * b1, n2 * b2, n3 * b3)


if __name__ == "__main__":
    key = jax.random.PRNGKey(0)
    k_y, k_w1, k_w2 = jax.random.split(key, 3)

    B, K = 2, 4
    n1, n2, n3 = 8, 8, 8
    b1, b2, b3 = 2, 3, 3

    y = jax.random.normal(k_y, (B, K, n1, n2, n3), dtype=jnp.float32)
    W1d = jax.random.normal(k_w1, (K, 1, b1, 1, 1), dtype=jnp.float32)
    W2d = jax.random.normal(k_w2, (K, 1, 1, b2, b3), dtype=jnp.float32)

    xhat = unfilt_backproj_3d_separable(y, W1d, W2d, apply_W1d_first=True)
    xhat = jax.block_until_ready(xhat)
    xhat2 = unfilt_backproj_3d_separable(y, W1d, W2d, apply_W1d_first=False)
    xhat2 = jax.block_until_ready(xhat2)

    # pure-JAX reference (same math as the two transpose convs)
    ref = jnp.einsum('bkpqr,ki,kjl->bpiqjrl', y,
                     W1d.reshape(K, b1), W2d.reshape(K, b2, b3))
    ref = ref.reshape(B, 1, n1 * b1, n2 * b2, n3 * b3)

    assert xhat.shape == (B, 1, n1 * b1, n2 * b2, n3 * b3), xhat.shape
    assert jnp.allclose(xhat, ref, atol=1e-4, rtol=1e-4)
    assert jnp.allclose(xhat2, ref, atol=1e-4, rtol=1e-4)
    print("KERNEL_OK")
</pallas_src>

<mosaic_0001>
module attributes {stable_mosaic.version = 11 : i64} {
  func.func @_backproj_kernel(%arg0: i32, %arg1: i32, %arg2: memref<18x4xf32, #tpu.memory_space<vmem>>, %arg3: memref<1x4x512xf32, #tpu.memory_space<vmem>>, %arg4: memref<1x18x512xf32, #tpu.memory_space<vmem>>) attributes {dimension_semantics = [#tpu.dimension_semantics<parallel>, #tpu.dimension_semantics<parallel>], iteration_bounds = array<i64: 2, 1>, scalar_prefetch = 0 : i64, scratch_operands = 0 : i64, tpu.core_type = #tpu.core_type<tc>, window_params = [{pipeline_mode = #tpu.pipeline_mode<synchronous>, transform_indices = @transform_0, window_bounds = array<i64: 18, 4>}, {transform_indices = @transform_1, window_bounds = array<i64: 1, 4, 512>}, {transform_indices = @transform_2, window_bounds = array<i64: 1, 18, 512>}]} {
    %c0 = arith.constant 0 : index
    %c0_0 = arith.constant 0 : index
    %0 = vector.load %arg2[%c0, %c0_0] : memref<18x4xf32, #tpu.memory_space<vmem>>, vector<18x4xf32>
    %c0_1 = arith.constant 0 : index
    %c0_2 = arith.constant 0 : index
    %c0_3 = arith.constant 0 : index
    %1 = vector.load %arg3[%c0_1, %c0_2, %c0_3] : memref<1x4x512xf32, #tpu.memory_space<vmem>>, vector<1x4x512xf32>
    %2 = vector.shape_cast %1 : vector<1x4x512xf32> to vector<4x512xf32>
    %cst = arith.constant dense<0.000000e+00> : vector<18x512xf32>
    %3 = tpu.matmul %0, %2, %cst {dimension_numbers = #tpu.dot_dimension_numbers<[1], [0], [0], [1], [0, 0, 1, 1], [], []>} : vector<18x4xf32>, vector<4x512xf32>, vector<18x512xf32> -> vector<18x512xf32>
    %c0_4 = arith.constant 0 : index
    %c0_5 = arith.constant 0 : index
    %c0_6 = arith.constant 0 : index
    %4 = vector.load %arg4[%c0_4, %c0_5, %c0_6] : memref<1x18x512xf32, #tpu.memory_space<vmem>>, vector<1x18x512xf32>
    %5 = vector.shape_cast %4 : vector<1x18x512xf32> to vector<18x512xf32>
    %6 = vector.shape_cast %3 : vector<18x512xf32> to vector<1x18x512xf32>
    tpu.vector_store %arg4[%c0_4, %c0_5, %c0_6], %6 {strides = array<i32>} : memref<1x18x512xf32, #tpu.memory_space<vmem>>, vector<1x18x512xf32>,
    return
  }
  func.func @transform_0(%arg0: i32, %arg1: i32) -> (i32, i32) {
    %c0_i32 = arith.constant 0 : i32
    %c0_i32_0 = arith.constant 0 : i32
    %c0_i32_1 = arith.constant 0 : i32
    return %c0_i32, %c0_i32_0 : i32, i32
  }
  func.func @transform_1(%arg0: i32, %arg1: i32) -> (i32, i32, i32) {
    %c0_i32 = arith.constant 0 : i32
    %c0_i32_0 = arith.constant 0 : i32
    return %arg0, %c0_i32, %arg1 : i32, i32, i32
  }
  func.func @transform_2(%arg0: i32, %arg1: i32) -> (i32, i32, i32) {
    %c0_i32 = arith.constant 0 : i32
    %c0_i32_0 = arith.constant 0 : i32
    return %arg0, %c0_i32, %arg1 : i32, i32, i32
  }
}

</mosaic_0001>

<llo_original>
// kernel: tpu_custom_call.1
$region0: #{tpu_custom_call.1}
  #allocation0 [shape = 'u32[]', space=smem, size = 0x4, offset = 0x4, fixed_abs, tag = 'smem constant byte address 0x4 - core index']
  #allocation1 [shape = 'u32[144,128]{1,0:T(1,128)}', space=vmem, size = 0x12000, scoped, tag = 'internal scratch']
  %s0 = inlined_call_operand.vmem [shape: f32[18,4], index: 0, kind: input, shape index: {}]
  %s1 = inlined_call_operand.hbm [shape: f32[2,4,512], index: 1, kind: input, shape index: {}]
  %s2 = inlined_call_operand.vmem [shape: f32[2,18,512], index: 2, kind: output, shape index: {}]
  %s3 = sld [smem:[#allocation0]]
  $region45: #{tpu_custom_call.1} parent=0
    _
  %s5 = ssub.s32 1, %s3
  %s6 = scalar_select 0, %s5, %s3
  $region1: #{tpu_custom_call.1} parent=0
    #allocation2 [shape = 'u8[16384]{0}', space=vmem, size = 0x4000, scoped, tag = 'input window, operand 1']
    #allocation3 [shape = 's32[2]{0}', space=sflag, size = 0x8, scoped, tag = 'scoped memory for tpu_custom_call.1']
    %7 = vsyncpa [#allocation3], 0
    %s8 = scalar_lea.sflag [#allocation3], 1
    %9 = vsyncpa %s8, 0
    loop: start=0, step=1, limit=4
    $region2: #{tpu_custom_call.1} parent=1 // loop_pre_header
      _
    $region3: #{tpu_custom_call.1} parent=1 // loop_header
      %s11 = sphi 0, %s15
      %p12 = scmp.ge.s32.totalorder %s11, 4
      %s18 = sphi 0, %s30
      %s19 = sphi 0, %s26
      %s20 = sphi 0, %s18
      %s21 = sphi 0, %s19
      %s22 = sphi 0, %s20
      %s23 = sphi 0, %s21
      %s31 = sphi 0, %s31
      %s33 = sphi 0, %s31
      %s34 = sphi 0, %s33
      %s48 = sphi 0, %s34
      %s56 = sphi 0, %s58
      %s59 = sphi 0, %s56
      %s60 = sphi 0, %s59
      %s76 = sphi 0, %s60
      %s84 = sphi 0, %s86
      %s87 = sphi 0, %s84
      %s88 = sphi 0, %s87
      %s104 = sphi 0, %s88
    $region4: #{tpu_custom_call.1} parent=1 // loop_header_branch
      %14 = sbr.rel (%p12) target = $region8
    $region5: #{tpu_custom_call.1} parent=1 // loop_body
      %s16 = ssub.s32 %s11, 1
      %s17 = ssub.s32 %s11, 2
      %s24 = sadd.s32 1, %s19
      %p25 = scmp.ge.s32.totalorder %s24, 1
      %s26 = scalar_select %p25, 0, %s24
      %s27 = sadd.s32 1, %s18
      %s28 = scalar_select %p25, %s27, %s18
      %p29 = scmp.ge.s32.totalorder %s28, 2
      %s30 = scalar_select %p29, 0, %s28
      %s32 = sadd.s32 %s31, 1
      %p35 = scmp.eq.s32.totalorder %s11, 1
      %p36 = scmp.ne.s32.totalorder %s31, %s33
      %p37 = scmp.eq.s32.totalorder %s11, 0
      %p38 = por %p36, %p37
      %p39 = scmp.ne.s32.totalorder %s31, %s33
      %p40 = scmp.eq.s32.totalorder %s16, 1
      %p41 = por %p39, %p40
      %p42 = scmp.ne.s32.totalorder %s33, %s34
      %p43 = scmp.eq.s32.totalorder %s16, 0
      %p44 = por %p42, %p43
      %p45 = scmp.ne.s32.totalorder %s33, %s34
      %p46 = scmp.eq.s32.totalorder %s17, 1
      %p47 = por %p45, %p46
      %p49 = scmp.ne.s32.totalorder %s34, %s48
      %p50 = scmp.eq.s32.totalorder %s17, 0
      %p51 = por %p49, %p50
      %s52 = ssub.s32 %s18, %s30
      %s53 = ssub.s32 %s19, %s26
      %s54 = sor.u32 %s52, %s53
      %p55 = scmp.eq.s32.totalorder %s54, 0
      %s57 = sadd.s32 %s56, 1
      %s58 = scalar_select %p55, %s56, %s57
      %p61 = pneg %p55
      %p62 = scmp.eq.s32.totalorder %s11, 1
      %p63 = por %p61, %p62
      %p64 = scmp.ne.s32.totalorder %s56, %s59
      %p65 = scmp.eq.s32.totalorder %s11, 0
      %p66 = por %p64, %p65
      %p67 = scmp.ne.s32.totalorder %s56, %s59
      %p68 = scmp.eq.s32.totalorder %s16, 1
      %p69 = por %p67, %p68
      %p70 = scmp.ne.s32.totalorder %s59, %s60
      %p71 = scmp.eq.s32.totalorder %s16, 0
      %p72 = por %p70, %p71
      %p73 = scmp.ne.s32.totalorder %s59, %s60
      %p74 = scmp.eq.s32.totalorder %s17, 1
      %p75 = por %p73, %p74
      %p77 = scmp.ne.s32.totalorder %s60, %s76
      %p78 = scmp.eq.s32.totalorder %s17, 0
      %p79 = por %p77, %p78
      %s80 = ssub.s32 %s18, %s30
      %s81 = ssub.s32 %s19, %s26
      %s82 = sor.u32 %s80, %s81
      %p83 = scmp.eq.s32.totalorder %s82, 0
      %s85 = sadd.s32 %s84, 1
      %s86 = scalar_select %p83, %s84, %s85
      %p89 = pneg %p83
      %p90 = scmp.eq.s32.totalorder %s11, 1
      %p91 = por %p89, %p90
      %p92 = scmp.ne.s32.totalorder %s84, %s87
      %p93 = scmp.eq.s32.totalorder %s11, 0
      %p94 = por %p92, %p93
      %p95 = scmp.ne.s32.totalorder %s84, %s87
      %p96 = scmp.eq.s32.totalorder %s16, 1
      %p97 = por %p95, %p96
      %p98 = scmp.ne.s32.totalorder %s87, %s88
      %p99 = scmp.eq.s32.totalorder %s16, 0
      %p100 = por %p98, %p99
      %p101 = scmp.ne.s32.totalorder %s87, %s88
      %p102 = scmp.eq.s32.totalorder %s17, 1
      %p103 = por %p101, %p102
      %p105 = scmp.ne.s32.totalorder %s88, %s104
      %p106 = scmp.eq.s32.totalorder %s17, 0
      %p107 = por %p105, %p106
      %p108 = scmp.le.s32.totalorder 1, %s11
      %p109 = scmp.lt.s32.totalorder %s11, 3
      %p110 = pnand %p108, %p109
      %p111 = pneg %p110
      // Predicated region
      $region9: #{tpu_custom_call.1} parent=5 // pred_check
        _
      $region10: #{tpu_custom_call.1} parent=5 // pred_check_branch
        %113 = sbr.rel (%p110) target = $region12
      $region11: #{tpu_custom_call.1} parent=5 // pred_region
        %s114 = ssub.s32 %s11, 1
        // Predicated region
        $region13: #{tpu_custom_call.1} parent=11 // pred_check
          %p115 = pneg %p44
        $region14: #{tpu_custom_call.1} parent=11 // pred_check_branch
          %117 = sbr.rel (%p115) target = $region16
        $region15: #{tpu_custom_call.1} parent=11 // pred_region
          _
        $region16: #{tpu_custom_call.1} parent=11 // pred_fallthru
          _
      $region12: #{tpu_custom_call.1} parent=5 // pred_fallthru
        _
      %p118 = scmp.lt.s32.totalorder %s11, 2
      // Predicated region
      $region17: #{tpu_custom_call.1} parent=5 // pred_check
        %p119 = pneg %p118
      $region18: #{tpu_custom_call.1} parent=5 // pred_check_branch
        %121 = sbr.rel (%p119) target = $region20
      $region19: #{tpu_custom_call.1} parent=5 // pred_region
        // Predicated region
        $region21: #{tpu_custom_call.1} parent=19 // pred_check
          %p122 = pneg %p66
        $region22: #{tpu_custom_call.1} parent=19 // pred_check_branch
          %124 = sbr.rel (%p122) target = $region24
        $region23: #{tpu_custom_call.1} parent=19 // pred_region
          %s125 = sand.u32 %s56, 1
          %s126 = scalar_lea.sflag [#allocation3], %s125
          %s127 = sand.u32 %s56, 1
          %s128 = smul.addr %s127, 16
          %s129 = scalar_lea.vmem [#allocation2], %s128
          %s130 = smul.u32 4, %s19
          %s132 = ssub.s32 256, 256
          %133 = vsyncadd %s126, %s132
          %s134 = smul.addr %s18, 4
          %s135 = sadd.s32 %s130, %s134
          %s136 = smul.addr %s135, 64
          %s137 = scalar_lea.hbm %s1, %s136
          %s139 = sshll.u32 %s129, 4
          %s140 = int_to_ptr.vmem [resolvable:$true] %s139
          %142 = dma.hbm_to_vmem [thread:$0]  %s137, 256, %s140, %s126
        $region24: #{tpu_custom_call.1} parent=19 // pred_fallthru
          _
      $region20: #{tpu_custom_call.1} parent=5 // pred_fallthru
        _
      %p143 = scmp.le.s32.totalorder 1, %s11
      %p144 = scmp.lt.s32.totalorder %s11, 3
      %p145 = pnand %p143, %p144
      %p146 = pneg %p145
      // Predicated region
      $region25: #{tpu_custom_call.1} parent=5 // pred_check
        _
      $region26: #{tpu_custom_call.1} parent=5 // pred_check_branch
        %148 = sbr.rel (%p145) target = $region28
      $region27: #{tpu_custom_call.1} parent=5 // pred_region
        %s149 = ssub.s32 %s11, 1
        %s150 = sand.u32 %s59, 1
        %s151 = scalar_lea.sflag [#allocation3], %s150
        %s152 = sand.u32 %s59, 1
        %s153 = smul.addr %s152, 16
        %s154 = scalar_lea.vmem [#allocation2], %s153
        // Predicated region
        $region29: #{tpu_custom_call.1} parent=27 // pred_check
          %p155 = pneg %p72
        $region30: #{tpu_custom_call.1} parent=27 // pred_check_branch
          %157 = sbr.rel (%p155) target = $region32
        $region31: #{tpu_custom_call.1} parent=27 // pred_region
          %158 = dma.done %s151, 256
        $region32: #{tpu_custom_call.1} parent=27 // pred_fallthru
          _
        %p159 = pneg %p44
        %p160 = pneg %p41
        %s161 = sand.u32 %s59, 1
        %s162 = scalar_lea.sflag [#allocation3], %s161
        %s163 = sand.u32 %s59, 1
        %s164 = smul.addr %s163, 16
        %s165 = scalar_lea.vmem [#allocation2], %s164
        %p166 = pneg %p72
        %p167 = pneg %p69
        %p168 = pneg %p100
        %p169 = pneg %p97
        %s170 = smul.u32 4, %s21
        %p171 = scmp.lt.s32.totalorder %s20, 1
        %s172 = scalar_select %p171, %s20, 1
        %p173 = scmp.lt.s32.totalorder %s170, 3
        %s174 = scalar_select %p173, %s170, 3
        %s175 = smul.addr %s172, 12
        %s176 = sadd.s32 %s174, %s175
        %s177 = smul.addr %s176, 8
        %s178 = scalar_lea.vmem %s2, %s177
        %s179 = smul.u32 4, %s21
        %s180 = smul.u32 4, %s21
        %p181 = scmp.lt.s32.totalorder %s20, 1
        %s182 = scalar_select %p181, %s20, 1
        %p183 = scmp.lt.s32.totalorder %s180, 3
        %s184 = scalar_select %p183, %s180, 3
        %s185 = smul.addr %s182, 12
        %s186 = sadd.s32 %s184, %s185
        %s187 = smul.addr %s186, 8
        %s188 = scalar_lea.vmem %s2, %s187
        %s189 = smul.u32 4, %s21
        %v190 = vld [vmem:[%s0] sm:$0xff]
        %v191 = vld [vmem:[%s0 + $0x8] sm:$0xff]
        %v192 = vld [vmem:[%s0 + $0x10] sm:$0x3]
        %v193 = vld [vmem:[%s154] sm:$0xff]
        %v194 = vld [vmem:[%s154 + $0x8] sm:$0xff]
        %v197 = vcombine.high %v193, %v193
        %v198 = vcombine.high %v194, %v194
        %vm199 = vcmask 31744
        %v201 = vsel %vm199, %v190, 0
        %v204 = vsel %vm199, %v191, 0
        %v207 = vsel %vm199, %v192, 0
        %vm209 = vcmask 1043456
        %v210 = vsel %vm209, %v193, 0
        %v212 = vsel %vm209, %v197, 0
        %v214 = vsel %vm209, %v194, 0
        %v216 = vsel %vm209, %v198, 0
        %218 = vmatprep.subr.mxu0 0.0
        %219 = vmatpush1.msra.mxu0 0.0
        %220 = vmatprep.subr.mxu0 0.0
        %221 = vmatpush1.msra.mxu0 0.0
        %222 = vmatprep.subr.mxu0 0.0
        %223 = vmatpush1.msra.mxu0 0.0
        %224 = vmatprep.subr.mxu0 0.0
        %225 = vmatpush1.msra.mxu0 0.0
        %226 = vmatprep.subr.mxu0 0.0
        %227 = vmatpush1.msra.mxu0 0.0
        %228 = vmatprep.subr.mxu0 0.0
        %229 = vmatpush1.msra.mxu0 0.0
        %230 = vmatprep.subr.mxu0 0.0
        %231 = vmatpush1.msra.mxu0 0.0
        %232 = vmatprep.subr.mxu0 0.0
        %233 = vmatpush1.msra.mxu0 0.0
        %234 = vmatprep.subr.mxu0 0.0
        %235 = vmatpush1.msra.mxu0 0.0
        %236 = vmatprep.subr.mxu0 0.0
        %237 = vmatpush1.msra.mxu0 0.0
        %238 = vmatprep.subr.mxu0 0.0
        %239 = vmatpush1.msra.mxu0 0.0
        %240 = vmatprep.subr.mxu0 0.0
        %241 = vmatpush1.msra.mxu0 0.0
        %242 = vmatprep.subr.mxu0 0.0
        %243 = vmatpush1.msra.mxu0 0.0
        %244 = vmatprep.subr.mxu0 0.0
        %245 = vmatpush1.msra.mxu0 0.0
        %246 = vmatprep.subr.mxu0 0.0
        %247 = vmatpush1.msra.mxu0 0.0
        %248 = vmatprep.subr.mxu0 %v212
        %249 = vmatpush1.msra.mxu0 %v210
        %250 = vmatprep.subr.mxu0 0.0
        %251 = vmatpush2.msra.mxu0 0.0
        %252 = vmatprep.subr.mxu0 0.0
        %253 = vmatpush2.msra.mxu0 0.0
        %254 = vmatprep.subr.mxu0 0.0
        %255 = vmatpush2.msra.mxu0 0.0
        %256 = vmatprep.subr.mxu0 0.0
        %257 = vmatpush2.msra.mxu0 0.0
        %258 = vmatprep.subr.mxu0 0.0
        %259 = vmatpush2.msra.mxu0 0.0
        %260 = vmatprep.subr.mxu0 0.0
        %261 = vmatpush2.msra.mxu0 0.0
        %262 = vmatprep.subr.mxu0 0.0
        %263 = vmatpush2.msra.mxu0 0.0
        %264 = vmatprep.subr.mxu0 0.0
        %265 = vmatpush2.msra.mxu0 0.0
        %266 = vmatprep.subr.mxu0 0.0
        %267 = vmatpush2.msra.mxu0 0.0
        %268 = vmatprep.subr.mxu0 0.0
        %269 = vmatpush2.msra.mxu0 0.0
        %270 = vmatprep.subr.mxu0 0.0
        %271 = vmatpush2.msra.mxu0 0.0
        %272 = vmatprep.subr.mxu0 0.0
        %273 = vmatpush2.msra.mxu0 0.0
        %274 = vmatprep.subr.mxu0 0.0
        %275 = vmatpush2.msra.mxu0 0.0
        %276 = vmatprep.subr.mxu0 0.0
        %277 = vmatpush2.msra.mxu0 0.0
        %278 = vmatprep.subr.mxu0 0.0
        %279 = vmatpush2.msra.mxu0 0.0
        %280 = vmatprep.subr.mxu0 0.0
        %281 = vmatpush2.msra.mxu0 0.0
        %282 = vmatprep.mubr.f32.mxu0 0.0
        %283 = vmatmul.mubr.f32.gmra.mxu0 %v201
        %v284 = vpop.f32.mrf.mxu0
        %v285 = vadd.f32 0.0, %v284
        %v286 = vpop.f32.mrf.mxu0
        %v287 = vadd.f32 0.0, %v286
        %288 = vmatprep.mubr.f32.mxu0 0.0
        %289 = vmatmul.mubr.f32.gmra.mxu0 %v204
        %v290 = vpop.f32.mrf.mxu0
        %v291 = vadd.f32 0.0, %v290
        %v292 = vpop.f32.mrf.mxu0
        %v293 = vadd.f32 0.0, %v292
        %294 = vmatprep.mubr.f32.mxu0 0.0
        %295 = vmatmul.mubr.f32.gmra.mxu0 %v207
        %v296 = vpop.f32.mrf.mxu0
        %v297 = vadd.f32 0.0, %v296
        %v298 = vpop.f32.mrf.mxu0
        %v299 = vadd.f32 0.0, %v298
        %300 = vdwg.mxu0
        %301 = vmatprep.subr.mxu0 0.0
        %302 = vmatpush1.msra.mxu0 0.0
        %303 = vmatprep.subr.mxu0 0.0
        %304 = vmatpush1.msra.mxu0 0.0
        %305 = vmatprep.subr.mxu0 0.0
        %306 = vmatpush1.msra.mxu0 0.0
        %307 = vmatprep.subr.mxu0 0.0
        %308 = vmatpush1.msra.mxu0 0.0
        %309 = vmatprep.subr.mxu0 0.0
        %310 = vmatpush1.msra.mxu0 0.0
        %311 = vmatprep.subr.mxu0 0.0
        %312 = vmatpush1.msra.mxu0 0.0
        %313 = vmatprep.subr.mxu0 0.0
        %314 = vmatpush1.msra.mxu0 0.0
        %315 = vmatprep.subr.mxu0 0.0
        %316 = vmatpush1.msra.mxu0 0.0
        %317 = vmatprep.subr.mxu0 0.0
        %318 = vmatpush1.msra.mxu0 0.0
        %319 = vmatprep.subr.mxu0 0.0
        %320 = vmatpush1.msra.mxu0 0.0
        %321 = vmatprep.subr.mxu0 0.0
        %322 = vmatpush1.msra.mxu0 0.0
        %323 = vmatprep.subr.mxu0 0.0
        %324 = vmatpush1.msra.mxu0 0.0
        %325 = vmatprep.subr.mxu0 0.0
        %326 = vmatpush1.msra.mxu0 0.0
        %327 = vmatprep.subr.mxu0 0.0
        %328 = vmatpush1.msra.mxu0 0.0
        %329 = vmatprep.subr.mxu0 0.0
        %330 = vmatpush1.msra.mxu0 0.0
        %331 = vmatprep.subr.mxu0 %v216
        %332 = vmatpush1.msra.mxu0 %v214
        %333 = vmatprep.subr.mxu0 0.0
        %334 = vmatpush2.msra.mxu0 0.0
        %335 = vmatprep.subr.mxu0 0.0
        %336 = vmatpush2.msra.mxu0 0.0
        %337 = vmatprep.subr.mxu0 0.0
        %338 = vmatpush2.msra.mxu0 0.0
        %339 = vmatprep.subr.mxu0 0.0
        %340 = vmatpush2.msra.mxu0 0.0
        %341 = vmatprep.subr.mxu0 0.0
        %342 = vmatpush2.msra.mxu0 0.0
        %343 = vmatprep.subr.mxu0 0.0
        %344 = vmatpush2.msra.mxu0 0.0
        %345 = vmatprep.subr.mxu0 0.0
        %346 = vmatpush2.msra.mxu0 0.0
        %347 = vmatprep.subr.mxu0 0.0
        %348 = vmatpush2.msra.mxu0 0.0
        %349 = vmatprep.subr.mxu0 0.0
        %350 = vmatpush2.msra.mxu0 0.0
        %351 = vmatprep.subr.mxu0 0.0
        %352 = vmatpush2.msra.mxu0 0.0
        %353 = vmatprep.subr.mxu0 0.0
        %354 = vmatpush2.msra.mxu0 0.0
        %355 = vmatprep.subr.mxu0 0.0
        %356 = vmatpush2.msra.mxu0 0.0
        %357 = vmatprep.subr.mxu0 0.0
        %358 = vmatpush2.msra.mxu0 0.0
        %359 = vmatprep.subr.mxu0 0.0
        %360 = vmatpush2.msra.mxu0 0.0
        %361 = vmatprep.subr.mxu0 0.0
        %362 = vmatpush2.msra.mxu0 0.0
        %363 = vmatprep.subr.mxu0 0.0
        %364 = vmatpush2.msra.mxu0 0.0
        %365 = vmatprep.mubr.f32.mxu0 0.0
        %366 = vmatmul.mubr.f32.gmra.mxu0 %v201
        %v367 = vpop.f32.mrf.mxu0
        %v368 = vadd.f32 0.0, %v367
        %v369 = vpop.f32.mrf.mxu0
        %v370 = vadd.f32 0.0, %v369
        %371 = vmatprep.mubr.f32.mxu0 0.0
        %372 = vmatmul.mubr.f32.gmra.mxu0 %v204
        %v373 = vpop.f32.mrf.mxu0
        %v374 = vadd.f32 0.0, %v373
        %v375 = vpop.f32.mrf.mxu0
        %v376 = vadd.f32 0.0, %v375
        %377 = vmatprep.mubr.f32.mxu0 0.0
        %378 = vmatmul.mubr.f32.gmra.mxu0 %v207
        %v379 = vpop.f32.mrf.mxu0
        %v380 = vadd.f32 0.0, %v379
        %v381 = vpop.f32.mrf.mxu0
        %v382 = vadd.f32 0.0, %v381
        %383 = vdwg.mxu0
        %384 = vst [vmem:[%s188] sm:$0xff] %v285
        %385 = vst [vmem:[%s188 + $0x8] sm:$0xff] %v287
        %386 = vst [vmem:[%s188 + $0x10] sm:$0xff] %v368
        %387 = vst [vmem:[%s188 + $0x18] sm:$0xff] %v370
        %388 = vst [vmem:[%s188 + $0x20] sm:$0xff] %v291
        %389 = vst [vmem:[%s188 + $0x28] sm:$0xff] %v293
        %390 = vst [vmem:[%s188 + $0x30] sm:$0xff] %v374
        %391 = vst [vmem:[%s188 + $0x38] sm:$0xff] %v376
        %392 = vst [vmem:[%s188 + $0x40] sm:$0x3] %v297
        %393 = vst [vmem:[%s188 + $0x48] sm:$0x3] %v299
        %394 = vst [vmem:[%s188 + $0x50] sm:$0x3] %v380
        %395 = vst [vmem:[%s188 + $0x58] sm:$0x3] %v382
        %s396 = smul.u32 4, %s21
        %p397 = scmp.lt.s32.totalorder %s20, 1
        %s398 = scalar_select %p397, %s20, 1
        %p399 = scmp.lt.s32.totalorder %s396, 3
        %s400 = scalar_select %p399, %s396, 3
        %s401 = smul.addr %s398, 12
        %s402 = sadd.s32 %s400, %s401
        %s403 = smul.addr %s402, 8
        %s404 = scalar_lea.vmem %s2, %s403
        // Predicated region
        $region33: #{tpu_custom_call.1} parent=27 // pred_check
          %p405 = pneg %p97
        $region34: #{tpu_custom_call.1} parent=27 // pred_check_branch
          %407 = sbr.rel (%p405) target = $region36
        $region35: #{tpu_custom_call.1} parent=27 // pred_region
          %s408 = smul.u32 4, %s21
        $region36: #{tpu_custom_call.1} parent=27 // pred_fallthru
          _
      $region28: #{tpu_custom_call.1} parent=5 // pred_fallthru
        _
      %p409 = scmp.le.s32.totalorder 2, %s11
      // Predicated region
      $region37: #{tpu_custom_call.1} parent=5 // pred_check
        %p410 = pneg %p409
      $region38: #{tpu_custom_call.1} parent=5 // pred_check_branch
        %412 = sbr.rel (%p410) target = $region40
      $region39: #{tpu_custom_call.1} parent=5 // pred_region
        %s413 = ssub.s32 %s11, 2
        // Predicated region
        $region41: #{tpu_custom_call.1} parent=39 // pred_check
          %p414 = pneg %p103
        $region42: #{tpu_custom_call.1} parent=39 // pred_check_branch
          %416 = sbr.rel (%p414) target = $region44
        $region43: #{tpu_custom_call.1} parent=39 // pred_region
          %s417 = smul.u32 4, %s23
          %p418 = scmp.lt.s32.totalorder %s22, 1
          %s419 = scalar_select %p418, %s22, 1
          %p420 = scmp.lt.s32.totalorder %s417, 3
          %s421 = scalar_select %p420, %s417, 3
          %s422 = smul.addr %s419, 12
          %s423 = sadd.s32 %s421, %s422
          %s424 = smul.addr %s423, 8
          %s425 = scalar_lea.vmem %s2, %s424
        $region44: #{tpu_custom_call.1} parent=39 // pred_fallthru
          _
      $region40: #{tpu_custom_call.1} parent=5 // pred_fallthru
        _
    $region6: #{tpu_custom_call.1} parent=1 // loop_footer
      %s15 = sadd.s32 1, %s11
    $region7: #{tpu_custom_call.1} parent=1 // loop_footer_branch
      %10 = sbr.rel target = $region3
    $region8: #{tpu_custom_call.1} parent=1 // loop_exit
      _
    %426 = vsyncpa [#allocation3], 1
    %s427 = scalar_lea.sflag [#allocation3], 1
    %428 = vsyncpa %s427, 1

</llo_original>
